<compile_context>
chip_gen: v6e
topology: v6e:2x2x1
jax: 0.10.0
libtpu: 0.0.40
codegen_flags: <defaults>
</compile_context>

<pallas_src>
import jax
import jax.numpy as jnp
import numpy as np
from jax.experimental import pallas as pl
from jax.experimental.pallas import tpu as pltpu


# ----------------------------------------------------------------------------
# Kernels
# ----------------------------------------------------------------------------
def _se_scale_kernel(x_ref, w1t_ref, w2t_ref, o_ref):
    """Single-stage: one block of `nb` flattened images.

    x_ref : (nb, C, HW)   lane-dense image block (input dtype)
    w1t   : (C, hidden)   first Linear, pre-transposed (bias-free)
    w2t   : (hidden, C)   second Linear, pre-transposed (bias-free)
    o_ref : (nb, C, HW)
    """
    x = x_ref[...]                                        # stays in input dtype
    hw = x.shape[-1]

    # f32-accumulating lane reduce: no full-slab f32 copy for bf16 inputs.
    pooled = jnp.sum(x, axis=-1, dtype=jnp.float32) * (1.0 / hw)   # (nb, C)

    # fc: Linear(C->hidden) -> ReLU -> Linear(hidden->C) -> sigmoid (all f32).
    h = jnp.maximum(
        jnp.dot(pooled, w1t_ref[...], preferred_element_type=jnp.float32), 0.0)
    y = jax.nn.sigmoid(
        jnp.dot(h, w2t_ref[...], preferred_element_type=jnp.float32))  # (nb, C)

    # Channel gate broadcast across the lane (spatial) axis, in input dtype.
    o_ref[...] = (x * y.astype(x.dtype)[:, :, None]).astype(o_ref.dtype)


# ----------------------------------------------------------------------------
# Sizing helpers
# ----------------------------------------------------------------------------
def _vmem_capacity_bytes():
    try:
        return int(pltpu.get_tpu_info().vmem_capacity_bytes)
    except Exception:
        return 64 * 1024 * 1024        # conservative (v7x-sized) default


def _pick_block_n(n, per_img_bytes, block_budget_bytes,
                  target_block_bytes=2 * 1024 * 1024):
    """Pick a batch-block size nb dividing n.

    Returns (nb, fits).  fits=False means even one image's double-buffered
    in+out footprint exceeds the budget -> caller must use the two-pass path.
    """
    if 4 * per_img_bytes > block_budget_bytes:
        return 1, False
    # Moderate blocks (~2 MiB) are already at HBM roofline; bigger only hurts
    # pipelining.  Also respect the VMEM budget (4x = double-buffered in+out).
    nb = max(1, min(n, target_block_bytes // max(per_img_bytes, 1)))
    nb = max(1, min(nb, block_budget_bytes // (4 * per_img_bytes)))
    nb = min(nb, n)
    while n % nb:                      # exact blocks: no padded batch rows
        nb -= 1
    # v7x megacore: prefer an even grid length >= 2 so both TensorCores work.
    if n >= 2:
        cand = nb
        while cand > 1 and (n // cand < 2 or (n // cand) % 2):
            cand -= 1
            while n % cand:
                cand -= 1
        nb = cand
    return nb, True


def _pick_hw_tile(hw, c, itemsize, budget_bytes, n_bufs):
    """Largest lane-aligned divisor of hw whose block fits budget / ~2 MiB."""
    per_col = max(1, c * itemsize)
    target = min(budget_bytes // (n_bufs * per_col),
                 (2 * 1024 * 1024) // per_col)
    cands = [d for d in range(128, hw, 128) if hw % d == 0]
    cands.append(hw)
    fit = [d for d in cands if d <= max(target, 1)]
    return max(fit) if fit else min(cands)


def _maybe_buffered_spec(block_shape, index_map, deep):
    """x input spec; request 3-deep pipelining when VMEM headroom allows."""
    if deep:
        try:
            return pl.BlockSpec(block_shape, index_map,
                                pipeline_mode=pl.Buffered(3))
        except TypeError:
            pass
    return pl.BlockSpec(block_shape, index_map)


# ----------------------------------------------------------------------------
# pallas_call wrappers
# ----------------------------------------------------------------------------
def _single_stage(x2, w1t, w2t, nb, vmem_limit, vmem_cap):
    N, C, HW = x2.shape
    hidden = w1t.shape[1]
    grid = (N // nb,)
    deep = (vmem_cap >= 100 * 1024 * 1024) and (grid[0] >= 3)   # v5e/v6e only
    return pl.pallas_call(
        _se_scale_kernel,
        out_shape=jax.ShapeDtypeStruct((N, C, HW), x2.dtype),
        grid=grid,
        in_specs=[
            _maybe_buffered_spec((nb, C, HW), lambda n: (n, 0, 0), deep),
            pl.BlockSpec((C, hidden), lambda n: (0, 0)),   # W1^T (resident)
            pl.BlockSpec((hidden, C), lambda n: (0, 0)),   # W2^T (resident)
        ],
        out_specs=pl.BlockSpec((nb, C, HW), lambda n: (n, 0, 0)),
        compiler_params=pltpu.CompilerParams(
            dimension_semantics=("parallel",),
            vmem_limit_bytes=vmem_limit,
        ),
    )(x2, w1t, w2t)


def _two_stage(x2, w1t, w2t, block_budget, vmem_limit):
    """Fallback for slabs that don't fit VMEM: pool+MLP, then tiled rescale."""
    N, C, HW = x2.shape
    hidden = w1t.shape[1]
    itemsize = jnp.dtype(x2.dtype).itemsize

    # ---- Stage 1: per-image channel gate y (N, C, 1), f32 --------------------
    hw_pool = _pick_hw_tile(HW, C, itemsize, block_budget, n_bufs=2)

    def pool_kernel(x_ref, w1t_ref, w2t_ref, y_ref, sum_ref):
        h = pl.program_id(1)

        @pl.when(h == 0)
        def _():
            sum_ref[...] = jnp.zeros_like(sum_ref)

        sum_ref[...] += jnp.sum(x_ref[...], axis=-1, dtype=jnp.float32)  # (1,C)

        @pl.when(h == pl.num_programs(1) - 1)
        def _():
            pooled = sum_ref[...] * (1.0 / HW)                           # (1,C)
            hdn = jnp.maximum(
                jnp.dot(pooled, w1t_ref[...],
                        preferred_element_type=jnp.float32), 0.0)
            y = jax.nn.sigmoid(
                jnp.dot(hdn, w2t_ref[...],
                        preferred_element_type=jnp.float32))             # (1,C)
            y_ref[...] = y[:, :, None]

    y = pl.pallas_call(
        pool_kernel,
        out_shape=jax.ShapeDtypeStruct((N, C, 1), jnp.float32),
        grid=(N, HW // hw_pool),
        in_specs=[
            pl.BlockSpec((1, C, hw_pool), lambda n, h: (n, 0, h)),
            pl.BlockSpec((C, hidden), lambda n, h: (0, 0)),
            pl.BlockSpec((hidden, C), lambda n, h: (0, 0)),
        ],
        out_specs=pl.BlockSpec((1, C, 1), lambda n, h: (n, 0, 0)),
        scratch_shapes=[pltpu.VMEM((1, C), jnp.float32)],
        compiler_params=pltpu.CompilerParams(
            dimension_semantics=("parallel", "arbitrary"),
            vmem_limit_bytes=vmem_limit,
        ),
    )(x2, w1t, w2t)

    # ---- Stage 2: spatially tiled elementwise rescale ------------------------
    hw_res = _pick_hw_tile(HW, C, itemsize, block_budget, n_bufs=4)

    def rescale_kernel(x_ref, y_ref, o_ref):
        xv = x_ref[...]                                   # (1, C, hw_res)
        o_ref[...] = (xv * y_ref[...].astype(xv.dtype)).astype(o_ref.dtype)

    return pl.pallas_call(
        rescale_kernel,
        out_shape=jax.ShapeDtypeStruct((N, C, HW), x2.dtype),
        grid=(N, HW // hw_res),
        in_specs=[
            pl.BlockSpec((1, C, hw_res), lambda n, h: (n, 0, h)),
            pl.BlockSpec((1, C, 1), lambda n, h: (n, 0, 0)),
        ],
        out_specs=pl.BlockSpec((1, C, hw_res), lambda n, h: (n, 0, h)),
        compiler_params=pltpu.CompilerParams(
            dimension_semantics=("parallel", "parallel"),
            vmem_limit_bytes=vmem_limit,
        ),
    )(x2, y)


def dwa_block(x, w1, w2):
    """x: (N, C, H, W); w1: (hidden, C); w2: (C, hidden)  (PyTorch Linear layout)."""
    N, C, H, W = x.shape
    HW = H * W
    itemsize = jnp.dtype(x.dtype).itemsize

    x2 = x.reshape(N, C, HW)                 # lane-dense last dim (HW)
    w1t = jnp.transpose(w1)                  # (C, hidden)
    w2t = jnp.transpose(w2)                  # (hidden, C)

    # Generation-aware VMEM budget: ~40 MiB on v7x (64 MiB/TC), 64 MiB on
    # v5e/v6e (128 MiB); block budget is derived from the same limit.
    vmem_cap = _vmem_capacity_bytes()
    vmem_limit = max(16 * 1024 * 1024, min(64 * 1024 * 1024, (vmem_cap * 5) // 8))
    block_budget = vmem_limit // 2

    per_img = C * HW * itemsize
    nb, fits = _pick_block_n(N, per_img, block_budget)

    if fits:
        out2 = _single_stage(x2, w1t, w2t, nb, vmem_limit, vmem_cap)
    else:
        out2 = _two_stage(x2, w1t, w2t, block_budget, vmem_limit)
    return out2.reshape(N, C, H, W)


def dwa_block_ref(x, w1, w2):
    """Pure-JAX reference matching the PyTorch forward."""
    pooled = x.mean(axis=(2, 3))                              # (N, C)
    h = jnp.maximum(pooled @ w1.T, 0.0)                       # (N, hidden)
    y = jax.nn.sigmoid(h @ w2.T)                              # (N, C)
    return x * y[:, :, None, None]


if __name__ == "__main__":
    key = jax.random.PRNGKey(0)
    N, C, H, W = 2, 16, 16, 16
    reduction = 4
    hidden = C // reduction                                   # = 4

    k0, k1, k2 = jax.random.split(key, 3)
    x = jax.random.normal(k0, (N, C, H, W), dtype=jnp.float32)
    # nn.Linear weights: (out_features, in_features), bias=False.
    w1 = jax.random.normal(k1, (hidden, C), dtype=jnp.float32) * 0.2
    w2 = jax.random.normal(k2, (C, hidden), dtype=jnp.float32) * 0.2

    out = dwa_block(x, w1, w2)
    out = jax.block_until_ready(out)

    ref = dwa_block_ref(x, w1, w2)
    np.testing.assert_allclose(np.asarray(out), np.asarray(ref),
                               rtol=1e-5, atol=1e-5)
    print("KERNEL_OK")
</pallas_src>

<mosaic_0001>
module attributes {stable_mosaic.version = 11 : i64} {
  func.func @_se_scale_kernel(%arg0: i32, %arg1: memref<1x16x256xf32, #tpu.memory_space<vmem>>, %arg2: memref<16x4xf32, #tpu.memory_space<vmem>>, %arg3: memref<4x16xf32, #tpu.memory_space<vmem>>, %arg4: memref<1x16x256xf32, #tpu.memory_space<vmem>>) attributes {dimension_semantics = [#tpu.dimension_semantics<parallel>], iteration_bounds = array<i64: 2>, scalar_prefetch = 0 : i64, scratch_operands = 0 : i64, tpu.core_type = #tpu.core_type<tc>, window_params = [{transform_indices = @transform_0, window_bounds = array<i64: 1, 16, 256>}, {pipeline_mode = #tpu.pipeline_mode<synchronous>, transform_indices = @transform_1, window_bounds = array<i64: 16, 4>}, {pipeline_mode = #tpu.pipeline_mode<synchronous>, transform_indices = @transform_2, window_bounds = array<i64: 4, 16>}, {transform_indices = @transform_3, window_bounds = array<i64: 1, 16, 256>}]} {
    %c0 = arith.constant 0 : index
    %c0_0 = arith.constant 0 : index
    %c0_1 = arith.constant 0 : index
    %0 = vector.load %arg1[%c0, %c0_0, %c0_1] : memref<1x16x256xf32, #tpu.memory_space<vmem>>, vector<1x16x256xf32>
    %cst = arith.constant dense<0.000000e+00> : vector<1x16xf32>
    %1 = vector.multi_reduction <add>, %0, %cst [2] : vector<1x16x256xf32> to vector<1x16xf32>
    %cst_2 = arith.constant 3.906250e-03 : f32
    %2 = vector.broadcast %cst_2 : f32 to vector<1x16xf32>
    %3 = arith.mulf %1, %2 : vector<1x16xf32>
    %c0_3 = arith.constant 0 : index
    %c0_4 = arith.constant 0 : index
    %4 = vector.load %arg2[%c0_3, %c0_4] : memref<16x4xf32, #tpu.memory_space<vmem>>, vector<16x4xf32>
    %cst_5 = arith.constant dense<0.000000e+00> : vector<1x4xf32>
    %5 = tpu.matmul %3, %4, %cst_5 {dimension_numbers = #tpu.dot_dimension_numbers<[1], [0], [0], [1], [0, 0, 1, 1], [], []>} : vector<1x16xf32>, vector<16x4xf32>, vector<1x4xf32> -> vector<1x4xf32>
    %cst_6 = arith.constant 0.000000e+00 : f32
    %6 = vector.broadcast %cst_6 : f32 to vector<1x4xf32>
    %7 = arith.maximumf %5, %6 : vector<1x4xf32>
    %c0_7 = arith.constant 0 : index
    %c0_8 = arith.constant 0 : index
    %8 = vector.load %arg3[%c0_7, %c0_8] : memref<4x16xf32, #tpu.memory_space<vmem>>, vector<4x16xf32>
    %cst_9 = arith.constant dense<0.000000e+00> : vector<1x16xf32>
    %9 = tpu.matmul %7, %8, %cst_9 {dimension_numbers = #tpu.dot_dimension_numbers<[1], [0], [0], [1], [0, 0, 1, 1], [], []>} : vector<1x4xf32>, vector<4x16xf32>, vector<1x16xf32> -> vector<1x16xf32>
    %10 = arith.negf %9 : vector<1x16xf32>
    %11 = math.exp %10 : vector<1x16xf32>
    %cst_10 = arith.constant 1.000000e+00 : f32
    %12 = vector.broadcast %cst_10 : f32 to vector<1x16xf32>
    %13 = arith.addf %12, %11 : vector<1x16xf32>
    %14 = arith.divf %12, %13 : vector<1x16xf32>
    %15 = vector.shape_cast %14 : vector<1x16xf32> to vector<1x16x1xf32>
    %16 = vector.broadcast %15 : vector<1x16x1xf32> to vector<1x16x256xf32>
    %17 = arith.mulf %0, %16 : vector<1x16x256xf32>
    %c0_11 = arith.constant 0 : index
    %c0_12 = arith.constant 0 : index
    %c0_13 = arith.constant 0 : index
    %18 = vector.load %arg4[%c0_11, %c0_12, %c0_13] : memref<1x16x256xf32, #tpu.memory_space<vmem>>, vector<1x16x256xf32>
    tpu.vector_store %arg4[%c0_11, %c0_12, %c0_13], %17 {strides = array<i32>} : memref<1x16x256xf32, #tpu.memory_space<vmem>>, vector<1x16x256xf32>,
    return
  }
  func.func @transform_0(%arg0: i32) -> (i32, i32, i32) {
    %c0_i32 = arith.constant 0 : i32
    %c0_i32_0 = arith.constant 0 : i32
    %c0_i32_1 = arith.constant 0 : i32
    return %arg0, %c0_i32, %c0_i32_0 : i32, i32, i32
  }
  func.func @transform_1(%arg0: i32) -> (i32, i32) {
    %c0_i32 = arith.constant 0 : i32
    %c0_i32_0 = arith.constant 0 : i32
    %c0_i32_1 = arith.constant 0 : i32
    return %c0_i32, %c0_i32_0 : i32, i32
  }
  func.func @transform_2(%arg0: i32) -> (i32, i32) {
    %c0_i32 = arith.constant 0 : i32
    %c0_i32_0 = arith.constant 0 : i32
    %c0_i32_1 = arith.constant 0 : i32
    return %c0_i32, %c0_i32_0 : i32, i32
  }
  func.func @transform_3(%arg0: i32) -> (i32, i32, i32) {
    %c0_i32 = arith.constant 0 : i32
    %c0_i32_0 = arith.constant 0 : i32
    %c0_i32_1 = arith.constant 0 : i32
    return %arg0, %c0_i32, %c0_i32_0 : i32, i32, i32
  }
}

</mosaic_0001>

<llo_original>
// kernel: tpu_custom_call.1
$region0: #{tpu_custom_call.1}
  #allocation0 [shape = 'u32[]', space=smem, size = 0x4, offset = 0x4, fixed_abs, tag = 'smem constant byte address 0x4 - core index']
  #allocation1 [shape = 'u32[144,128]{1,0:T(1,128)}', space=vmem, size = 0x12000, scoped, tag = 'internal scratch']
  %s0 = inlined_call_operand.hbm [shape: f32[2,16,256], index: 0, kind: input, shape index: {}]
  %s1 = inlined_call_operand.vmem [shape: f32[16,4], index: 1, kind: input, shape index: {}]
  %s2 = inlined_call_operand.vmem [shape: f32[4,16], index: 2, kind: input, shape index: {}]
  %s3 = inlined_call_operand.hbm [shape: f32[2,16,256], index: 3, kind: output, shape index: {}]
  %s4 = sld [smem:[#allocation0]]
  $region49: #{tpu_custom_call.1} parent=0
    _
  %s6 = ssub.s32 1, %s4
  %s7 = scalar_select 0, %s6, %s4
  $region1: #{tpu_custom_call.1} parent=0
    #allocation2 [shape = 'u8[32768]{0}', space=vmem, size = 0x8000, scoped, tag = 'input window, operand 0']
    #allocation3 [shape = 's32[2]{0}', space=sflag, size = 0x8, scoped, tag = 'scoped memory for tpu_custom_call.1']
    #allocation4 [shape = 's32[2]{0}', space=sflag, size = 0x8, scoped, tag = 'scoped memory for tpu_custom_call.1']
    #allocation5 [shape = 'u8[32768]{0}', space=vmem, size = 0x8000, scoped, tag = 'output window, operand 0']
    %8 = vsyncpa [#allocation3], 0
    %s9 = scalar_lea.sflag [#allocation3], 1
    %10 = vsyncpa %s9, 0
    %11 = vsyncpa [#allocation4], 0
    %s12 = scalar_lea.sflag [#allocation4], 1
    %13 = vsyncpa %s12, 0
    loop: start=0, step=1, limit=4
    $region2: #{tpu_custom_call.1} parent=1 // loop_pre_header
      _
    $region3: #{tpu_custom_call.1} parent=1 // loop_header
      %s15 = sphi 0, %s19
      %p16 = scmp.ge.s32.totalorder %s15, 4
      %s25 = sphi 0, %s27
      %s28 = sphi 0, %s25
      %s29 = sphi 0, %s28
      %s45 = sphi 0, %s29
      %s49 = sphi 0, %s49
      %s51 = sphi 0, %s49
      %s52 = sphi 0, %s51
      %s66 = sphi 0, %s52
      %s70 = sphi 0, %s70
      %s72 = sphi 0, %s70
      %s73 = sphi 0, %s72
      %s87 = sphi 0, %s73
      %s93 = sphi 0, %s95
      %s96 = sphi 0, %s93
      %s97 = sphi 0, %s96
      %s113 = sphi 0, %s97
    $region4: #{tpu_custom_call.1} parent=1 // loop_header_branch
      %18 = sbr.rel (%p16) target = $region8
    $region5: #{tpu_custom_call.1} parent=1 // loop_body
      %s20 = ssub.s32 %s15, 1
      %s21 = ssub.s32 %s15, 2
      %s22 = sadd.s32 %s15, 1
      %s23 = ssub.s32 %s15, %s22
      %p24 = scmp.eq.s32.totalorder %s23, 0
      %s26 = sadd.s32 %s25, 1
      %s27 = scalar_select %p24, %s25, %s26
      %p30 = pneg %p24
      %p31 = scmp.eq.s32.totalorder %s15, 1
      %p32 = por %p30, %p31
      %p33 = scmp.ne.s32.totalorder %s25, %s28
      %p34 = scmp.eq.s32.totalorder %s15, 0
      %p35 = por %p33, %p34
      %p36 = scmp.ne.s32.totalorder %s25, %s28
      %p37 = scmp.eq.s32.totalorder %s20, 1
      %p38 = por %p36, %p37
      %p39 = scmp.ne.s32.totalorder %s28, %s29
      %p40 = scmp.eq.s32.totalorder %s20, 0
      %p41 = por %p39, %p40
      %p42 = scmp.ne.s32.totalorder %s28, %s29
      %p43 = scmp.eq.s32.totalorder %s21, 1
      %p44 = por %p42, %p43
      %p46 = scmp.ne.s32.totalorder %s29, %s45
      %p47 = scmp.eq.s32.totalorder %s21, 0
      %p48 = por %p46, %p47
      %s50 = sadd.s32 %s49, 1
      %p53 = scmp.eq.s32.totalorder %s15, 1
      %p54 = scmp.ne.s32.totalorder %s49, %s51
      %p55 = scmp.eq.s32.totalorder %s15, 0
      %p56 = por %p54, %p55
      %p57 = scmp.ne.s32.totalorder %s49, %s51
      %p58 = scmp.eq.s32.totalorder %s20, 1
      %p59 = por %p57, %p58
      %p60 = scmp.ne.s32.totalorder %s51, %s52
      %p61 = scmp.eq.s32.totalorder %s20, 0
      %p62 = por %p60, %p61
      %p63 = scmp.ne.s32.totalorder %s51, %s52
      %p64 = scmp.eq.s32.totalorder %s21, 1
      %p65 = por %p63, %p64
      %p67 = scmp.ne.s32.totalorder %s52, %s66
      %p68 = scmp.eq.s32.totalorder %s21, 0
      %p69 = por %p67, %p68
      %s71 = sadd.s32 %s70, 1
      %p74 = scmp.eq.s32.totalorder %s15, 1
      %p75 = scmp.ne.s32.totalorder %s70, %s72
      %p76 = scmp.eq.s32.totalorder %s15, 0
      %p77 = por %p75, %p76
      %p78 = scmp.ne.s32.totalorder %s70, %s72
      %p79 = scmp.eq.s32.totalorder %s20, 1
      %p80 = por %p78, %p79
      %p81 = scmp.ne.s32.totalorder %s72, %s73
      %p82 = scmp.eq.s32.totalorder %s20, 0
      %p83 = por %p81, %p82
      %p84 = scmp.ne.s32.totalorder %s72, %s73
      %p85 = scmp.eq.s32.totalorder %s21, 1
      %p86 = por %p84, %p85
      %p88 = scmp.ne.s32.totalorder %s73, %s87
      %p89 = scmp.eq.s32.totalorder %s21, 0
      %p90 = por %p88, %p89
      %s91 = ssub.s32 %s15, %s22
      %p92 = scmp.eq.s32.totalorder %s91, 0
      %s94 = sadd.s32 %s93, 1
      %s95 = scalar_select %p92, %s93, %s94
      %p98 = pneg %p92
      %p99 = scmp.eq.s32.totalorder %s15, 1
      %p100 = por %p98, %p99
      %p101 = scmp.ne.s32.totalorder %s93, %s96
      %p102 = scmp.eq.s32.totalorder %s15, 0
      %p103 = por %p101, %p102
      %p104 = scmp.ne.s32.totalorder %s93, %s96
      %p105 = scmp.eq.s32.totalorder %s20, 1
      %p106 = por %p104, %p105
      %p107 = scmp.ne.s32.totalorder %s96, %s97
      %p108 = scmp.eq.s32.totalorder %s20, 0
      %p109 = por %p107, %p108
      %p110 = scmp.ne.s32.totalorder %s96, %s97
      %p111 = scmp.eq.s32.totalorder %s21, 1
      %p112 = por %p110, %p111
      %p114 = scmp.ne.s32.totalorder %s97, %s113
      %p115 = scmp.eq.s32.totalorder %s21, 0
      %p116 = por %p114, %p115
      %p117 = scmp.le.s32.totalorder 1, %s15
      %p118 = scmp.lt.s32.totalorder %s15, 3
      %p119 = pnand %p117, %p118
      %p120 = pneg %p119
      // Predicated region
      $region9: #{tpu_custom_call.1} parent=5 // pred_check
        _
      $region10: #{tpu_custom_call.1} parent=5 // pred_check_branch
        %122 = sbr.rel (%p119) target = $region12
      $region11: #{tpu_custom_call.1} parent=5 // pred_region
        %s123 = ssub.s32 %s15, 1
        // Predicated region
        $region13: #{tpu_custom_call.1} parent=11 // pred_check
          %p124 = pneg %p62
        $region14: #{tpu_custom_call.1} parent=11 // pred_check_branch
          %126 = sbr.rel (%p124) target = $region16
        $region15: #{tpu_custom_call.1} parent=11 // pred_region
          _
        $region16: #{tpu_custom_call.1} parent=11 // pred_fallthru
          _
        // Predicated region
        $region17: #{tpu_custom_call.1} parent=11 // pred_check
          %p127 = pneg %p83
        $region18: #{tpu_custom_call.1} parent=11 // pred_check_branch
          %129 = sbr.rel (%p127) target = $region20
        $region19: #{tpu_custom_call.1} parent=11 // pred_region
          _
        $region20: #{tpu_custom_call.1} parent=11 // pred_fallthru
          _
      $region12: #{tpu_custom_call.1} parent=5 // pred_fallthru
        _
      %p130 = scmp.lt.s32.totalorder %s15, 2
      // Predicated region
      $region21: #{tpu_custom_call.1} parent=5 // pred_check
        %p131 = pneg %p130
      $region22: #{tpu_custom_call.1} parent=5 // pred_check_branch
        %133 = sbr.rel (%p131) target = $region24
      $region23: #{tpu_custom_call.1} parent=5 // pred_region
        // Predicated region
        $region25: #{tpu_custom_call.1} parent=23 // pred_check
          %p134 = pneg %p35
        $region26: #{tpu_custom_call.1} parent=23 // pred_check_branch
          %136 = sbr.rel (%p134) target = $region28
        $region27: #{tpu_custom_call.1} parent=23 // pred_region
          %s137 = sand.u32 %s25, 1
          %s138 = scalar_lea.sflag [#allocation3], %s137
          %s139 = sand.u32 %s25, 1
          %s140 = smul.addr %s139, 32
          %s141 = scalar_lea.vmem [#allocation2], %s140
          %s143 = ssub.s32 512, 512
          %144 = vsyncadd %s138, %s143
          %s145 = smul.addr %s15, 4
          %s146 = smul.addr %s145, 128
          %s147 = scalar_lea.hbm %s0, %s146
          %s148 = sshll.u32 %s141, 4
          %s149 = int_to_ptr.vmem [resolvable:$true] %s148
          %154 = dma.hbm_to_vmem [thread:$0]  %s147, 512, %s149, %s138, 256, 256, 16
        $region28: #{tpu_custom_call.1} parent=23 // pred_fallthru
          _
      $region24: #{tpu_custom_call.1} parent=5 // pred_fallthru
        _
      %p155 = scmp.le.s32.totalorder 1, %s15
      %p156 = scmp.lt.s32.totalorder %s15, 3
      %p157 = pnand %p155, %p156
      %p158 = pneg %p157
      // Predicated region
      $region29: #{tpu_custom_call.1} parent=5 // pred_check
        _
      $region30: #{tpu_custom_call.1} parent=5 // pred_check_branch
        %160 = sbr.rel (%p157) target = $region32
      $region31: #{tpu_custom_call.1} parent=5 // pred_region
        %s161 = ssub.s32 %s15, 1
        %s162 = sand.u32 %s28, 1
        %s163 = scalar_lea.sflag [#allocation3], %s162
        %s164 = sand.u32 %s28, 1
        %s165 = smul.addr %s164, 32
        %s166 = scalar_lea.vmem [#allocation2], %s165
        // Predicated region
        $region33: #{tpu_custom_call.1} parent=31 // pred_check
          %p167 = pneg %p41
        $region34: #{tpu_custom_call.1} parent=31 // pred_check_branch
          %169 = sbr.rel (%p167) target = $region36
        $region35: #{tpu_custom_call.1} parent=31 // pred_region
          %170 = dma.done %s163, 512
        $region36: #{tpu_custom_call.1} parent=31 // pred_fallthru
          _
        %s171 = sand.u32 %s28, 1
        %s172 = scalar_lea.sflag [#allocation3], %s171
        %s173 = sand.u32 %s28, 1
        %s174 = smul.addr %s173, 32
        %s175 = scalar_lea.vmem [#allocation2], %s174
        %p176 = pneg %p41
        %p177 = pneg %p38
        %p178 = pneg %p62
        %p179 = pneg %p59
        %p180 = pneg %p83
        %p181 = pneg %p80
        %p182 = pneg %p109
        %p183 = pneg %p106
        %s184 = sand.u32 %s96, 1
        %s185 = scalar_lea.sflag [#allocation4], %s184
        %s186 = sand.u32 %s96, 1
        %s187 = smul.addr %s186, 32
        %s188 = scalar_lea.vmem [#allocation5], %s187
        %v189 = vld [vmem:[%s166] sm:$0xff]
        %v190 = vld [vmem:[%s166 + $0x8] sm:$0xff]
        %v191 = vld [vmem:[%s166 + $0x10] sm:$0xff]
        %v192 = vld [vmem:[%s166 + $0x18] sm:$0xff]
        %v193 = vadd.f32 %v189, %v190
        %194 = vadd.xlane.f32.xlu0 %v193
        %v195 = vpop.xlane.xlu0 %194
        %v196 = vadd.f32 %v191, %v192
        %197 = vadd.xlane.f32.xlu0 %v196
        %v198 = vpop.xlane.xlu0 %197
        %v199 = vmul.f32 %v195, 0.00390625
        %v200 = vmul.f32 %v198, 0.00390625
        %v201 = vld [vmem:[%s1] sm:$0xff]
        %v202 = vld [vmem:[%s1 + $0x8] sm:$0xff]
        %v205 = vlaneseq
        %v206 = vand.u32 %v205, 127
        %v207 = vlaneseq
        %v208 = vshrl.u32 %v207, 7
        %v209 = vsub.s32 %v206, %v208
        %v210 = vrot.slane %v199, %v209
        %v211 = vadd.s32 %v206, 4294967288
        %v212 = vlaneseq
        %v213 = vshrl.u32 %v212, 7
        %v214 = vsub.s32 %v211, %v213
        %v215 = vrot.slane %v200, %v214
        %vm216 = vcmask 130112
        %v217 = vsel %vm216, %v215, %v210
        %vm218 = vcmask 130048
        %v219 = vsel %vm218, %v217, 0
        %221 = vmatprep.subr.mxu0 0.0
        %222 = vmatpush1.msra.mxu0 0.0
        %223 = vmatprep.subr.mxu0 0.0
        %224 = vmatpush1.msra.mxu0 0.0
        %225 = vmatprep.subr.mxu0 0.0
        %226 = vmatpush1.msra.mxu0 0.0
        %227 = vmatprep.subr.mxu0 0.0
        %228 = vmatpush1.msra.mxu0 0.0
        %229 = vmatprep.subr.mxu0 0.0
        %230 = vmatpush1.msra.mxu0 0.0
        %231 = vmatprep.subr.mxu0 0.0
        %232 = vmatpush1.msra.mxu0 0.0
        %233 = vmatprep.subr.mxu0 0.0
        %234 = vmatpush1.msra.mxu0 0.0
        %235 = vmatprep.subr.mxu0 0.0
        %236 = vmatpush1.msra.mxu0 0.0
        %237 = vmatprep.subr.mxu0 0.0
        %238 = vmatpush1.msra.mxu0 0.0
        %239 = vmatprep.subr.mxu0 0.0
        %240 = vmatpush1.msra.mxu0 0.0
        %241 = vmatprep.subr.mxu0 0.0
        %242 = vmatpush1.msra.mxu0 0.0
        %243 = vmatprep.subr.mxu0 0.0
        %244 = vmatpush1.msra.mxu0 0.0
        %245 = vmatprep.subr.mxu0 0.0
        %246 = vmatpush1.msra.mxu0 0.0
        %247 = vmatprep.subr.mxu0 0.0
        %248 = vmatpush1.msra.mxu0 0.0
        %249 = vmatprep.subr.mxu0 0.0
        %250 = vmatpush1.msra.mxu0 %v202
        %251 = vmatprep.subr.mxu0 0.0
        %252 = vmatpush1.msra.mxu0 %v201
        %253 = vmatprep.subr.mxu0 0.0
        %254 = vmatpush2.msra.mxu0 0.0
        %255 = vmatprep.subr.mxu0 0.0
        %256 = vmatpush2.msra.mxu0 0.0
        %257 = vmatprep.subr.mxu0 0.0
        %258 = vmatpush2.msra.mxu0 0.0
        %259 = vmatprep.subr.mxu0 0.0
        %260 = vmatpush2.msra.mxu0 0.0
        %261 = vmatprep.subr.mxu0 0.0
        %262 = vmatpush2.msra.mxu0 0.0
        %263 = vmatprep.subr.mxu0 0.0
        %264 = vmatpush2.msra.mxu0 0.0
        %265 = vmatprep.subr.mxu0 0.0
        %266 = vmatpush2.msra.mxu0 0.0
        %267 = vmatprep.subr.mxu0 0.0
        %268 = vmatpush2.msra.mxu0 0.0
        %269 = vmatprep.subr.mxu0 0.0
        %270 = vmatpush2.msra.mxu0 0.0
        %271 = vmatprep.subr.mxu0 0.0
        %272 = vmatpush2.msra.mxu0 0.0
        %273 = vmatprep.subr.mxu0 0.0
        %274 = vmatpush2.msra.mxu0 0.0
        %275 = vmatprep.subr.mxu0 0.0
        %276 = vmatpush2.msra.mxu0 0.0
        %277 = vmatprep.subr.mxu0 0.0
        %278 = vmatpush2.msra.mxu0 0.0
        %279 = vmatprep.subr.mxu0 0.0
        %280 = vmatpush2.msra.mxu0 0.0
        %281 = vmatprep.subr.mxu0 0.0
        %282 = vmatpush2.msra.mxu0 0.0
        %283 = vmatprep.subr.mxu0 0.0
        %284 = vmatpush2.msra.mxu0 0.0
        %285 = vmatprep.mubr.f32.mxu0 0.0
        %286 = vmatmul.mubr.f32.gmra.mxu0 %v219
        %v287 = vpop.f32.mrf.mxu0
        %v288 = vadd.f32 0.0, %v287
        %v289 = vpop.f32.mrf.mxu0
        %290 = vdwg.mxu0
        %v291 = vmax.f32 %v288, 0.0
        %v292 = vld [vmem:[%s2] sm:$0xf]
        %vm293 = vcmask 31744
        %v295 = vsel %vm293, %v291, 0
        %vm297 = vcmask 1043456
        %v299 = vsel %vm297, %v292, 0
        %301 = vmatprep.subr.mxu0 0.0
        %302 = vmatpush1.msra.mxu0 0.0
        %303 = vmatprep.subr.mxu0 0.0
        %304 = vmatpush1.msra.mxu0 0.0
        %305 = vmatprep.subr.mxu0 0.0
        %306 = vmatpush1.msra.mxu0 0.0
        %307 = vmatprep.subr.mxu0 0.0
        %308 = vmatpush1.msra.mxu0 0.0
        %309 = vmatprep.subr.mxu0 0.0
        %310 = vmatpush1.msra.mxu0 0.0
        %311 = vmatprep.subr.mxu0 0.0
        %312 = vmatpush1.msra.mxu0 0.0
        %313 = vmatprep.subr.mxu0 0.0
        %314 = vmatpush1.msra.mxu0 0.0
        %315 = vmatprep.subr.mxu0 0.0
        %316 = vmatpush1.msra.mxu0 0.0
        %317 = vmatprep.subr.mxu0 0.0
        %318 = vmatpush1.msra.mxu0 0.0
        %319 = vmatprep.subr.mxu0 0.0
        %320 = vmatpush1.msra.mxu0 0.0
        %321 = vmatprep.subr.mxu0 0.0
        %322 = vmatpush1.msra.mxu0 0.0
        %323 = vmatprep.subr.mxu0 0.0
        %324 = vmatpush1.msra.mxu0 0.0
        %325 = vmatprep.subr.mxu0 0.0
        %326 = vmatpush1.msra.mxu0 0.0
        %327 = vmatprep.subr.mxu0 0.0
        %328 = vmatpush1.msra.mxu0 0.0
        %329 = vmatprep.subr.mxu0 0.0
        %330 = vmatpush1.msra.mxu0 0.0
        %331 = vmatprep.subr.mxu0 0.0
        %332 = vmatpush1.msra.mxu0 %v299
        %333 = vmatprep.subr.mxu0 0.0
        %334 = vmatpush2.msra.mxu0 0.0
        %335 = vmatprep.subr.mxu0 0.0
        %336 = vmatpush2.msra.mxu0 0.0
        %337 = vmatprep.subr.mxu0 0.0
        %338 = vmatpush2.msra.mxu0 0.0
        %339 = vmatprep.subr.mxu0 0.0
        %340 = vmatpush2.msra.mxu0 0.0
        %341 = vmatprep.subr.mxu0 0.0
        %342 = vmatpush2.msra.mxu0 0.0
        %343 = vmatprep.subr.mxu0 0.0
        %344 = vmatpush2.msra.mxu0 0.0
        %345 = vmatprep.subr.mxu0 0.0
        %346 = vmatpush2.msra.mxu0 0.0
        %347 = vmatprep.subr.mxu0 0.0
        %348 = vmatpush2.msra.mxu0 0.0
        %349 = vmatprep.subr.mxu0 0.0
        %350 = vmatpush2.msra.mxu0 0.0
        %351 = vmatprep.subr.mxu0 0.0
        %352 = vmatpush2.msra.mxu0 0.0
        %353 = vmatprep.subr.mxu0 0.0
        %354 = vmatpush2.msra.mxu0 0.0
        %355 = vmatprep.subr.mxu0 0.0
        %356 = vmatpush2.msra.mxu0 0.0
        %357 = vmatprep.subr.mxu0 0.0
        %358 = vmatpush2.msra.mxu0 0.0
        %359 = vmatprep.subr.mxu0 0.0
        %360 = vmatpush2.msra.mxu0 0.0
        %361 = vmatprep.subr.mxu0 0.0
        %362 = vmatpush2.msra.mxu0 0.0
        %363 = vmatprep.subr.mxu0 0.0
        %364 = vmatpush2.msra.mxu0 0.0
        %365 = vmatprep.mubr.f32.mxu0 0.0
        %366 = vmatmul.mubr.f32.gmra.mxu0 %v295
        %v367 = vpop.f32.mrf.mxu0
        %v368 = vadd.f32 0.0, %v367
        %v369 = vpop.f32.mrf.mxu0
        %370 = vdwg.mxu0
        %v371 = vxor.u32 %v368, 2147483648
        %v372 = vmul.f32 %v371, 1.442695
        %v373 = vpow.pop %v372
        %v374 = vadd.f32 %v373, 1.0
        %v375 = vrcp.pop %v374
        %v376 = vmul.f32 1.0, %v375
        %v377 = vlaneseq
        %v378 = vshrl.u32 %v377, 7
        %v379 = vsub.s32 0, %v378
        %v380 = vrot.slane %v376, %v379
        %382 = vbcast.lane.b32.xlu0 %v380, 256
        %v383 = vpop.permute.xlu0 %382
        %s385 = sor.u32 256, 8
        %386 = vbcast.lane.b32.xlu0 %v380, %s385
        %v387 = vpop.permute.xlu0 %386
        %v388 = vmul.f32 %v189, %v383
        %v389 = vmul.f32 %v190, %v383
        %v390 = vmul.f32 %v191, %v387
        %v391 = vmul.f32 %v192, %v387
        %392 = vst [vmem:[%s188] sm:$0xff] %v388
        %393 = vst [vmem:[%s188 + $0x8] sm:$0xff] %v389
        %394 = vst [vmem:[%s188 + $0x10] sm:$0xff] %v390
        %395 = vst [vmem:[%s188 + $0x18] sm:$0xff] %v391
        %s396 = sand.u32 %s96, 1
        %s397 = scalar_lea.sflag [#allocation4], %s396
        %s398 = sand.u32 %s96, 1
        %s399 = smul.addr %s398, 32
        %s400 = scalar_lea.vmem [#allocation5], %s399
        // Predicated region
        $region37: #{tpu_custom_call.1} parent=31 // pred_check
          %p401 = pneg %p106
        $region38: #{tpu_custom_call.1} parent=31 // pred_check_branch
          %403 = sbr.rel (%p401) target = $region40
        $region39: #{tpu_custom_call.1} parent=31 // pred_region
          %s405 = ssub.s32 512, 512
          %406 = vsyncadd %s397, %s405
          %s407 = smul.addr %s20, 4
          %s408 = smul.addr %s407, 128
          %s409 = scalar_lea.hbm %s3, %s408
          %s410 = sshll.u32 %s400, 4
          %s411 = int_to_ptr.vmem [resolvable:$true] %s410
          %416 = dma.vmem_to_hbm [thread:$0]  %s411, 512, %s409, %s397, 256, 256, 16
        $region40: #{tpu_custom_call.1} parent=31 // pred_fallthru
          _
      $region32: #{tpu_custom_call.1} parent=5 // pred_fallthru
        _
      %p417 = scmp.le.s32.totalorder 2, %s15
      // Predicated region
      $region41: #{tpu_custom_call.1} parent=5 // pred_check
        %p418 = pneg %p417
      $region42: #{tpu_custom_call.1} parent=5 // pred_check_branch
        %420 = sbr.rel (%p418) target = $region44
      $region43: #{tpu_custom_call.1} parent=5 // pred_region
        %s421 = ssub.s32 %s15, 2
        // Predicated region
        $region45: #{tpu_custom_call.1} parent=43 // pred_check
          %p422 = pneg %p112
        $region46: #{tpu_custom_call.1} parent=43 // pred_check_branch
          %424 = sbr.rel (%p422) target = $region48
        $region47: #{tpu_custom_call.1} parent=43 // pred_region
          %s425 = sand.u32 %s97, 1
          %s426 = scalar_lea.sflag [#allocation4], %s425
          %s427 = sand.u32 %s97, 1
          %s428 = smul.addr %s427, 32
          %s429 = scalar_lea.vmem [#allocation5], %s428
          %430 = dma.done %s426, 512
        $region48: #{tpu_custom_call.1} parent=43 // pred_fallthru
          _
      $region44: #{tpu_custom_call.1} parent=5 // pred_fallthru
        _
    $region6: #{tpu_custom_call.1} parent=1 // loop_footer
      %s19 = sadd.s32 1, %s15
    $region7: #{tpu_custom_call.1} parent=1 // loop_footer_branch
      %14 = sbr.rel target = $region3
    $region8: #{tpu_custom_call.1} parent=1 // loop_exit
      _
    %431 = vsyncpa [#allocation3], 1
    %s432 = scalar_lea.sflag [#allocation3], 1
    %433 = vsyncpa %s432, 1
    %434 = vsyncpa [#allocation4], 1
    %s435 = scalar_lea.sflag [#allocation4], 1
    %436 = vsyncpa %s435, 1

</llo_original>
